<compile_context>
chip_gen: v7x
topology: tpu7x:2x2x1
jax: 0.10.0
libtpu: 0.0.40
codegen_flags: <defaults>
</compile_context>

<pallas_src>
import functools

import jax
import jax.numpy as jnp
from jax.experimental import pallas as pl
from jax.experimental.pallas import tpu as pltpu


def _avg_kl_kernel(l1_ref, l2_ref, o_ref, *, tile_b, batch):
    """Per-tile partial sums of the symmetric KL term.

    For each sample r with logits x1, x2:
        sum_c (p1 - p2) * (ls1 - ls2)  ==  KL(p2||p1) + KL(p1||p2)
    (the two F.kl_div element sums, before 'batchmean' division).
    The kernel reduces only over the batch (sublane) axis of its tile and keeps
    the class/lane axis dense; the wrapper does the final tiny reduce + /(2B).
    """
    i = pl.program_id(0)

    l1 = l1_ref[...].astype(jnp.float32)
    l2 = l2_ref[...].astype(jnp.float32)

    def log_softmax_and_softmax(x):
        # Single exp pass: reuse e = exp(x - max) for both log_softmax and softmax.
        m = jnp.max(x, axis=-1, keepdims=True)
        s = x - m
        e = jnp.exp(s)
        denom = jnp.sum(e, axis=-1, keepdims=True)
        ls = s - jnp.log(denom)                       # log_softmax
        p = e * pl.reciprocal(denom, approx=False)    # softmax (per-row 1/denom)
        return ls, p

    ls1, p1 = log_softmax_and_softmax(l1)
    ls2, p2 = log_softmax_and_softmax(l2)

    # Algebraic fusion: p2*(ls2-ls1) + p1*(ls1-ls2) == (p1 - p2) * (ls1 - ls2)
    term = (p1 - p2) * (ls1 - ls2)

    # Mask out rows past the true batch size (only needed for a partial last tile).
    if batch % tile_b != 0:
        row = i * tile_b + jax.lax.broadcasted_iota(jnp.int32, term.shape, 0)
        term = jnp.where(row < batch, term, 0.0)

    # Reduce over the batch (sublane) axis only; keep a lane-dense (1, 1, C) output.
    o_ref[...] = jnp.sum(term, axis=0, keepdims=True)[None]


def _choose_batch_tile(batch, classes, itemsize):
    """Pick a batch tile that fits a conservative VMEM budget (v7x-safe)."""
    # Estimated VMEM per tile row:
    #   2 inputs * 2 pipeline buffers * C * itemsize   (auto-pipelined DMA buffers)
    # + ~8 f32 temporaries of width C                  (in-kernel working set)
    per_row_bytes = classes * (4 * itemsize + 8 * 4)
    budget_bytes = 24 << 20              # leaves headroom even on v7x (64 MiB VMEM)
    tb = budget_bytes // per_row_bytes
    tb = int(min(tb, 1024, batch))       # >1024-row tiles add no HBM-BW benefit
    if tb >= batch:
        return batch                     # single tile == full dim (always legal)
    return max(8, (tb // 8) * 8)         # keep sublane-aligned tiles


def average_kl_divergence(net1_logits, net2_logits):
    """0.5 * (KL(p2||p1) + KL(p1||p2)) with 'batchmean' reduction over dim=1."""
    assert net1_logits.shape == net2_logits.shape
    assert net1_logits.ndim == 2
    B, C = net1_logits.shape

    tile_b = _choose_batch_tile(B, C, jnp.dtype(net1_logits.dtype).itemsize)
    num_tiles = pl.cdiv(B, tile_b)

    kernel = functools.partial(_avg_kl_kernel, tile_b=tile_b, batch=B)

    partials = pl.pallas_call(
        kernel,
        out_shape=jax.ShapeDtypeStruct((num_tiles, 1, C), jnp.float32),
        grid_spec=pltpu.PrefetchScalarGridSpec(
            num_scalar_prefetch=0,
            grid=(num_tiles,),
            in_specs=[
                pl.BlockSpec((tile_b, C), lambda i: (i, 0)),
                pl.BlockSpec((tile_b, C), lambda i: (i, 0)),
            ],
            out_specs=pl.BlockSpec((1, 1, C), lambda i: (i, 0, 0)),
        ),
        compiler_params=pltpu.CompilerParams(
            # Independent per-tile outputs -> grid axis shards across TensorCores.
            dimension_semantics=("parallel",),
            vmem_limit_bytes=48 << 20,
        ),
    )(net1_logits, net2_logits)

    # Tiny final reduction: sum of partials, 'batchmean' divide, average of the 2 KLs.
    return jnp.sum(partials) / (2.0 * B)


def _reference(net1_logits, net2_logits):
    """Plain-JAX reference reproducing the PyTorch forward."""
    ls1 = jax.nn.log_softmax(net1_logits.astype(jnp.float32), axis=1)
    ls2 = jax.nn.log_softmax(net2_logits.astype(jnp.float32), axis=1)
    p1 = jnp.exp(ls1)
    p2 = jnp.exp(ls2)
    B = net1_logits.shape[0]
    kl1 = jnp.sum(p2 * (ls2 - ls1)) / B   # kl_div(log_softmax(l1), softmax(l2))
    kl2 = jnp.sum(p1 * (ls1 - ls2)) / B   # kl_div(log_softmax(l2), softmax(l1))
    return (kl1 + kl2) / 2.0


if __name__ == "__main__":
    key = jax.random.PRNGKey(0)
    k1, k2 = jax.random.split(key)
    B, C = 8, 128                         # small (batch, num_classes)
    net1_logits = jax.random.normal(k1, (B, C), dtype=jnp.float32)
    net2_logits = jax.random.normal(k2, (B, C), dtype=jnp.float32)

    out = jax.block_until_ready(average_kl_divergence(net1_logits, net2_logits))
    ref = jax.block_until_ready(_reference(net1_logits, net2_logits))
    assert jnp.allclose(out, ref, rtol=1e-5, atol=1e-6), (out, ref)

    print("KERNEL_OK")
</pallas_src>

<mosaic_0001>
module attributes {stable_mosaic.version = 11 : i64} {
  func.func @_avg_kl_kernel(%arg0: i32, %arg1: memref<8x128xf32, #tpu.memory_space<vmem>>, %arg2: memref<8x128xf32, #tpu.memory_space<vmem>>, %arg3: memref<1x1x128xf32, #tpu.memory_space<vmem>>) attributes {dimension_semantics = [#tpu.dimension_semantics<parallel>], iteration_bounds = array<i64: 1>, scalar_prefetch = 0 : i64, scratch_operands = 0 : i64, tpu.core_type = #tpu.core_type<tc>, window_params = [{transform_indices = @transform_0, window_bounds = array<i64: 8, 128>}, {transform_indices = @transform_1, window_bounds = array<i64: 8, 128>}, {transform_indices = @transform_2, window_bounds = array<i64: 1, 1, 128>}]} {
    %c0 = arith.constant 0 : index
    %c0_0 = arith.constant 0 : index
    %0 = vector.load %arg1[%c0, %c0_0] : memref<8x128xf32, #tpu.memory_space<vmem>>, vector<8x128xf32>
    %c0_1 = arith.constant 0 : index
    %c0_2 = arith.constant 0 : index
    %1 = vector.load %arg2[%c0_1, %c0_2] : memref<8x128xf32, #tpu.memory_space<vmem>>, vector<8x128xf32>
    %cst = arith.constant dense<0xFF800000> : vector<8xf32>
    %2 = vector.multi_reduction <maximumf>, %0, %cst [1] : vector<8x128xf32> to vector<8xf32>
    %3 = vector.shape_cast %2 : vector<8xf32> to vector<8x1xf32>
    %4 = vector.broadcast %3 : vector<8x1xf32> to vector<8x128xf32>
    %5 = arith.subf %0, %4 : vector<8x128xf32>
    %6 = math.exp %5 : vector<8x128xf32>
    %cst_3 = arith.constant dense<0.000000e+00> : vector<8xf32>
    %7 = vector.multi_reduction <add>, %6, %cst_3 [1] : vector<8x128xf32> to vector<8xf32>
    %8 = vector.shape_cast %7 : vector<8xf32> to vector<8x1xf32>
    %9 = math.log %8 : vector<8x1xf32>
    %10 = vector.broadcast %9 : vector<8x1xf32> to vector<8x128xf32>
    %11 = arith.subf %5, %10 : vector<8x128xf32>
    %12 = tpu.reciprocal %8 : vector<8x1xf32> -> vector<8x1xf32>
    %13 = vector.broadcast %12 : vector<8x1xf32> to vector<8x128xf32>
    %14 = arith.mulf %6, %13 : vector<8x128xf32>
    %cst_4 = arith.constant dense<0xFF800000> : vector<8xf32>
    %15 = vector.multi_reduction <maximumf>, %1, %cst_4 [1] : vector<8x128xf32> to vector<8xf32>
    %16 = vector.shape_cast %15 : vector<8xf32> to vector<8x1xf32>
    %17 = vector.broadcast %16 : vector<8x1xf32> to vector<8x128xf32>
    %18 = arith.subf %1, %17 : vector<8x128xf32>
    %19 = math.exp %18 : vector<8x128xf32>
    %cst_5 = arith.constant dense<0.000000e+00> : vector<8xf32>
    %20 = vector.multi_reduction <add>, %19, %cst_5 [1] : vector<8x128xf32> to vector<8xf32>
    %21 = vector.shape_cast %20 : vector<8xf32> to vector<8x1xf32>
    %22 = math.log %21 : vector<8x1xf32>
    %23 = vector.broadcast %22 : vector<8x1xf32> to vector<8x128xf32>
    %24 = arith.subf %18, %23 : vector<8x128xf32>
    %25 = tpu.reciprocal %21 : vector<8x1xf32> -> vector<8x1xf32>
    %26 = vector.broadcast %25 : vector<8x1xf32> to vector<8x128xf32>
    %27 = arith.mulf %19, %26 : vector<8x128xf32>
    %28 = arith.subf %14, %27 : vector<8x128xf32>
    %29 = arith.subf %11, %24 : vector<8x128xf32>
    %30 = arith.mulf %28, %29 : vector<8x128xf32>
    %cst_6 = arith.constant dense<0.000000e+00> : vector<128xf32>
    %31 = vector.multi_reduction <add>, %30, %cst_6 [0] : vector<8x128xf32> to vector<128xf32>
    %32 = vector.shape_cast %31 : vector<128xf32> to vector<1x128xf32>
    %33 = vector.shape_cast %32 : vector<1x128xf32> to vector<1x1x128xf32>
    %c0_7 = arith.constant 0 : index
    %c0_8 = arith.constant 0 : index
    %c0_9 = arith.constant 0 : index
    %34 = vector.load %arg3[%c0_7, %c0_8, %c0_9] : memref<1x1x128xf32, #tpu.memory_space<vmem>>, vector<1x1x128xf32>
    tpu.vector_store %arg3[%c0_7, %c0_8, %c0_9], %33 {strides = array<i32>} : memref<1x1x128xf32, #tpu.memory_space<vmem>>, vector<1x1x128xf32>,
    return
  }
  func.func @transform_0(%arg0: i32) -> (i32, i32) {
    %c0_i32 = arith.constant 0 : i32
    %c0_i32_0 = arith.constant 0 : i32
    return %arg0, %c0_i32 : i32, i32
  }
  func.func @transform_1(%arg0: i32) -> (i32, i32) {
    %c0_i32 = arith.constant 0 : i32
    %c0_i32_0 = arith.constant 0 : i32
    return %arg0, %c0_i32 : i32, i32
  }
  func.func @transform_2(%arg0: i32) -> (i32, i32, i32) {
    %c0_i32 = arith.constant 0 : i32
    %c0_i32_0 = arith.constant 0 : i32
    %c0_i32_1 = arith.constant 0 : i32
    return %arg0, %c0_i32, %c0_i32_0 : i32, i32, i32
  }
}

</mosaic_0001>

<llo_original>
// kernel: tpu_custom_call.1
$region0: #{tpu_custom_call.1}
  #allocation0 [shape = 'u32[]', space=smem, size = 0x4, offset = 0x4, fixed_abs, tag = 'smem constant byte address 0x4 - core index']
  #allocation1 [shape = 'u32[144,128]{1,0:T(1,128)}', space=vmem, size = 0x12000, scoped, tag = 'internal scratch']
  %s0 = inlined_call_operand.hbm [shape: f32[8,128], index: 0, kind: input, shape index: {}]
  %s1 = inlined_call_operand.hbm [shape: f32[8,128], index: 1, kind: input, shape index: {}]
  %s2 = inlined_call_operand.hbm [shape: f32[1,1,128], index: 2, kind: output, shape index: {}]
  %s3 = sld [smem:[#allocation0]]
  $region26: #{tpu_custom_call.1} parent=0
    _
  %s5 = ssub.s32 1, %s3
  %s6 = scalar_select 0, %s5, %s3
  $region1: #{tpu_custom_call.1} parent=0
    #allocation2 [shape = 'u8[4096]{0}', space=vmem, size = 0x1000, scoped, tag = 'input window, operand 0, single buffered']
    #allocation3 [shape = 's32[1]{0}', space=sflag, size = 0x4, scoped, tag = 'scoped memory for tpu_custom_call.1']
    #allocation4 [shape = 's32[1]{0}', space=sflag, size = 0x4, scoped, tag = 'scoped memory for tpu_custom_call.1']
    #allocation5 [shape = 'u8[4096]{0}', space=vmem, size = 0x1000, scoped, tag = 'input window, operand 1, single buffered']
    #allocation6 [shape = 's32[1]{0}', space=sflag, size = 0x4, scoped, tag = 'scoped memory for tpu_custom_call.1']
    #allocation7 [shape = 'u8[512]{0}', space=vmem, size = 0x400, scoped, tag = 'output window, operand 0, single buffered']
    %7 = vsyncpa [#allocation3], 0
    %8 = vsyncpa [#allocation6], 0
    %9 = vsyncpa [#allocation4], 0
    // Predicated region
    $region2: #{tpu_custom_call.1} parent=1 // pred_check
      _
    $region3: #{tpu_custom_call.1} parent=1 // pred_check_branch
      %11 = sbr.rel (0) target = $region5
    $region4: #{tpu_custom_call.1} parent=1 // pred_region
      %s13 = ssub.s32 128, 128
      %14 = vsyncadd [#allocation3], %s13
      %s16 = sshll.u32 [#allocation2], 4
      %s17 = int_to_ptr.vmem [resolvable:$true] %s16
      %19 = dma.hbm_to_vmem [thread:$0]  %s0, 128, %s17, [#allocation3]
    $region5: #{tpu_custom_call.1} parent=1 // pred_fallthru
      _
    // Predicated region
    $region6: #{tpu_custom_call.1} parent=1 // pred_check
      _
    $region7: #{tpu_custom_call.1} parent=1 // pred_check_branch
      %21 = sbr.rel (0) target = $region9
    $region8: #{tpu_custom_call.1} parent=1 // pred_region
      %s23 = ssub.s32 128, 128
      %24 = vsyncadd [#allocation6], %s23
      %s26 = sshll.u32 [#allocation5], 4
      %s27 = int_to_ptr.vmem [resolvable:$true] %s26
      %29 = dma.hbm_to_vmem [thread:$0]  %s1, 128, %s27, [#allocation6]
    $region9: #{tpu_custom_call.1} parent=1 // pred_fallthru
      _
    // Predicated region
    $region10: #{tpu_custom_call.1} parent=1 // pred_check
      _
    $region11: #{tpu_custom_call.1} parent=1 // pred_check_branch
      %31 = sbr.rel (0) target = $region13
    $region12: #{tpu_custom_call.1} parent=1 // pred_region
      %32 = dma.done [#allocation3], 128
    $region13: #{tpu_custom_call.1} parent=1 // pred_fallthru
      _
    // Predicated region
    $region14: #{tpu_custom_call.1} parent=1 // pred_check
      _
    $region15: #{tpu_custom_call.1} parent=1 // pred_check_branch
      %34 = sbr.rel (0) target = $region17
    $region16: #{tpu_custom_call.1} parent=1 // pred_region
      %35 = dma.done [#allocation6], 128
    $region17: #{tpu_custom_call.1} parent=1 // pred_fallthru
      _
    %v36 = vld [vmem:[#allocation2] sm:$0xff]
    %v37 = vld [vmem:[#allocation5] sm:$0xff]
    %38 = vmax.xlane.f32.xlu0 %v36
    %v39 = vpop.xlane.xlu0 %38
    %v40 = vsub.f32 %v36, %v39
    %v41 = vmul.f32 %v40, 1.442695
    %v42 = vpow.pop %v41
    %43 = vadd.xlane.f32.xlu0 %v42
    %v44 = vpop.xlane.xlu0 %43
    %v45 = vlog2.pop %v44
    %v46 = vmul.f32 %v45, 0.6931472
    %v47 = vsub.f32 %v40, %v46
    %v48 = vrcp.pop %v44
    %v49 = vmul.f32 %v42, %v48
    %50 = vmax.xlane.f32.xlu0 %v37
    %v51 = vpop.xlane.xlu0 %50
    %v52 = vsub.f32 %v37, %v51
    %v53 = vmul.f32 %v52, 1.442695
    %v54 = vpow.pop %v53
    %55 = vadd.xlane.f32.xlu0 %v54
    %v56 = vpop.xlane.xlu0 %55
    %v57 = vlog2.pop %v56
    %v58 = vmul.f32 %v57, 0.6931472
    %v59 = vsub.f32 %v52, %v58
    %v60 = vrcp.pop %v56
    %v61 = vmul.f32 %v54, %v60
    %v62 = vsub.f32 %v49, %v61
    %v63 = vsub.f32 %v47, %v59
    %v64 = vmul.f32 %v62, %v63
    %v65 = vrot.slane %v64, 4
    %v66 = vadd.f32 %v64, %v65
    %v67 = vrot.slane %v66, 2
    %v68 = vadd.f32 %v66, %v67
    %v69 = vrot.slane %v68, 1
    %v70 = vadd.f32 %v68, %v69
    %71 = vst [vmem:[#allocation7] sm:$0x1] %v70
    // Predicated region
    $region18: #{tpu_custom_call.1} parent=1 // pred_check
      _
    $region19: #{tpu_custom_call.1} parent=1 // pred_check_branch
      %73 = sbr.rel (0) target = $region21
    $region20: #{tpu_custom_call.1} parent=1 // pred_region
      %s75 = ssub.s32 16, 16
      %76 = vsyncadd [#allocation4], %s75
      %s78 = sshll.u32 [#allocation7], 4
      %s79 = int_to_ptr.vmem [resolvable:$true] %s78
      %81 = dma.vmem_to_hbm [thread:$0]  %s79, 16, %s2, [#allocation4]
    $region21: #{tpu_custom_call.1} parent=1 // pred_fallthru
      _
    // Predicated region
    $region22: #{tpu_custom_call.1} parent=1 // pred_check
      _
    $region23: #{tpu_custom_call.1} parent=1 // pred_check_branch
      %83 = sbr.rel (0) target = $region25
    $region24: #{tpu_custom_call.1} parent=1 // pred_region
      %84 = dma.done [#allocation4], 16
    $region25: #{tpu_custom_call.1} parent=1 // pred_fallthru
      _
    %85 = vsyncpa [#allocation3], 1
    %86 = vsyncpa [#allocation6], 1
    %87 = vsyncpa [#allocation4], 1

</llo_original>
